<compile_context>
chip_gen: v7x
topology: tpu7x:2x2x1
jax: 0.10.0
libtpu: 0.0.40
codegen_flags: <defaults>
</compile_context>

<pallas_src>
import math

import numpy as np
import jax
import jax.numpy as jnp
from jax.experimental import pallas as pl
from jax.experimental.pallas import tpu as pltpu


def _round_up(a: int, b: int) -> int:
    return -(-a // b) * b


def _choose_pack_factor(n: int, c: int, total: int) -> int:
    """How many original rows to pack per kernel row (lane density)."""
    if total >= 512:
        return 1
    # Keep the (k*C, k*total) selector constant small (it scales with k^2).
    k_cap = int(math.sqrt((2 << 20) / (4.0 * c * total)))
    k_cap = max(1, min(k_cap, 64, max(1, n)))
    if k_cap == 1:
        return 1
    k_lo = min(max(1, math.ceil(512 / total)), k_cap)
    best_k, best_d = k_lo, -1.0
    for k in range(k_lo, k_cap + 1):
        width = k * total
        density = width / (_round_up(width, 128))
        if density >= 0.93:
            return k
        if density > best_d:
            best_k, best_d = k, density
    return best_k


def _choose_tile_rows(rows: int, per_row: int, budget: int,
                      row_align: int, out_row_bytes: int) -> int:
    """Row-tile: big (>= MiBs of output per step), VMEM-safe, even grid."""
    max_tile = max(row_align, budget // max(per_row, 1))
    if rows <= max_tile and (rows * out_row_bytes <= (4 << 20)
                             or rows < 2 * row_align):
        return rows  # whole problem in one block (single DMA in/out)
    max_tile = min(max_tile, rows)
    groups = -(-rows // (2 * max_tile))       # ceil
    grid_len = 2 * groups                     # even #steps -> 2-TC balance
    tile = _round_up(-(-rows // grid_len), row_align)
    return min(tile, rows)


def one_hot_encoding_0d(x: jax.Array, cardinalities, out_dtype=jnp.int8, *,
                        _force_budget_bytes=None) -> jax.Array:
    """Pallas equivalent of OneHotEncoding0d.forward for 2-D integer input.

    Output values are only 0/1, so int8 is the default; pass out_dtype=jnp.int32
    for a wider type.  Out-of-range values encode to all-zero rows.
    """
    assert x.ndim == 2
    n, c = x.shape
    cards = [int(v) for v in cardinalities]
    assert c == len(cards)
    total = int(sum(cards))
    assert total > 0
    max_card = max(cards)
    # Float equality is exact only while class indices / values are exactly
    # representable: < 2^24 for f32, <= 255 for the bf16 fast path.
    assert max_card < (1 << 24), "cardinality too large for exact f32 compare"
    compute_dtype = jnp.bfloat16 if max_card <= 255 else jnp.float32

    out_dtype = np.dtype(out_dtype)
    out_bytes = out_dtype.itemsize

    # ---- Row packing factor and packed constants (block-diagonal selector).
    k = _choose_pack_factor(n, c, total)
    width = k * total
    kc = k * c

    sel_1 = np.zeros((c, total), np.float32)
    cls_1 = np.zeros((total,), np.float32)
    off = 0
    for j, card in enumerate(cards):
        sel_1[j, off:off + card] = 1.0
        cls_1[off:off + card] = np.arange(card, dtype=np.float32)
        off += card
    sel = np.zeros((kc, width), np.float32)
    for g in range(k):
        sel[g * c:(g + 1) * c, g * total:(g + 1) * total] = sel_1
    cls = np.tile(cls_1, k)[None, :]
    sel_arr = jnp.asarray(sel).astype(compute_dtype)
    cls_arr = jnp.asarray(cls)  # f32: compare happens in f32 on every gen

    # ---- Pack input rows (pad n to a multiple of k; padded rows are sliced
    #      off the output so their encodings never escape).
    x32 = x.astype(jnp.int32)
    n_pad = _round_up(n, k)
    if n_pad != n:
        x32 = jnp.pad(x32, ((0, n_pad - n), (0, 0)))
    rows = n_pad // k
    x_packed = x32.reshape(rows, kc)

    # ---- Honest per-row VMEM model (lane padding + f32 intermediate) and a
    #      per-generation budget.
    lane_w = _round_up(width, 128)
    lane_c = _round_up(kc, 128)
    in_row = lane_c * 4                    # int32 input block
    out_row = lane_w * out_bytes           # output block
    inter_row = lane_w * 4                 # f32 x_per_lane intermediate
    per_row = 2 * (in_row + out_row) + inter_row   # double-buffered in/out

    try:
        capacity = int(pltpu.get_tpu_info().vmem_capacity_bytes)
    except Exception:  # pragma: no cover - conservative fallback (v7x per-TC)
        capacity = 64 << 20
    const_bytes = (2 * sel_arr.size * sel_arr.dtype.itemsize
                   + 2 * cls_arr.size * 4)
    budget = max(4 << 20, int(0.40 * capacity) - const_bytes)
    if _force_budget_bytes is not None:
        budget = int(_force_budget_bytes)

    row_align = 32 if out_bytes == 1 else (16 if out_bytes == 2 else 8)
    tile = _choose_tile_rows(rows, per_row, budget, row_align, out_row)
    grid = (pl.cdiv(rows, tile),)

    vmem_need = tile * per_row + const_bytes + (1 << 20)
    vmem_limit = max(int(1.5 * vmem_need), 16 << 20)
    vmem_limit = min(vmem_limit, int(0.85 * capacity))

    cost = pl.CostEstimate(
        flops=2 * rows * kc * width,
        transcendentals=0,
        bytes_accessed=(rows * (kc * 4 + width * out_bytes)
                        + sel_arr.size * sel_arr.dtype.itemsize
                        + cls_arr.size * 4),
    )

    def kernel(x_ref, sel_ref, cls_ref, o_ref):
        # Replicate each feature's value across its lane range with one MXU
        # op, then one fused compare + one lane-dense store.
        xf = x_ref[...].astype(jnp.float32).astype(compute_dtype)
        per_lane = jnp.dot(xf, sel_ref[...], preferred_element_type=jnp.float32)
        o_ref[...] = (per_lane == cls_ref[...]).astype(o_ref.dtype)

    out_packed = pl.pallas_call(
        kernel,
        out_shape=jax.ShapeDtypeStruct((rows, width), out_dtype),
        grid=grid,
        in_specs=[
            pl.BlockSpec((tile, kc), lambda i: (i, 0)),
            pl.BlockSpec((kc, width), lambda i: (0, 0)),
            pl.BlockSpec((1, width), lambda i: (0, 0)),
        ],
        out_specs=pl.BlockSpec((tile, width), lambda i: (i, 0)),
        compiler_params=pltpu.CompilerParams(
            dimension_semantics=("parallel",),
            vmem_limit_bytes=int(vmem_limit),
        ),
        cost_estimate=cost,
    )(x_packed, sel_arr, cls_arr)

    out = out_packed.reshape(n_pad, total)
    if n_pad != n:
        out = out[:n]
    return out


def _reference(x: jax.Array, cardinalities, dtype=jnp.int8) -> jax.Array:
    cols = []
    for j, card in enumerate(cardinalities):
        oh = jax.nn.one_hot(x[..., j], int(card) + 1, dtype=dtype)[:, :-1]
        cols.append(oh)
    return jnp.concatenate(cols, axis=-1)


if __name__ == "__main__":
    key = jax.random.PRNGKey(0)

    # --- Small demo matching the module spec (tabular integer features) -----
    cards = [3, 5, 2, 7]
    batch = 8
    keys = jax.random.split(key, len(cards) + 1)
    # Each column j takes values in [0, card_j]; value == card_j -> all-zeros.
    cols = [
        jax.random.randint(keys[j], (batch, 1), 0, cards[j] + 1, dtype=jnp.int32)
        for j in range(len(cards))
    ]
    x = jnp.concatenate(cols, axis=-1)  # (8, 4) int32

    out = jax.block_until_ready(one_hot_encoding_0d(x, cards))
    ref = _reference(x, cards, dtype=jnp.int8)
    assert out.shape == (batch, sum(cards)), out.shape
    assert out.dtype == jnp.int8
    assert bool(jnp.all(out == ref)), "mismatch vs reference (demo, int8)"

    # --- Larger case: exercises row packing (k > 1) + lane-dense int8 store -
    cards2 = [13, 7, 29, 5, 11, 64]
    n2 = 4104
    keys2 = jax.random.split(keys[-1], len(cards2) + 1)
    cols2 = [
        jax.random.randint(keys2[j], (n2, 1), 0, cards2[j] + 1, dtype=jnp.int32)
        for j in range(len(cards2))
    ]
    x2 = jnp.concatenate(cols2, axis=-1)  # (4104, 6) int32

    out2 = jax.block_until_ready(one_hot_encoding_0d(x2, cards2, out_dtype=jnp.int8))
    ref2 = _reference(x2, cards2, dtype=jnp.int8)
    assert out2.shape == (n2, sum(cards2)), out2.shape
    assert out2.dtype == jnp.int8
    assert bool(jnp.all(out2 == ref2)), "mismatch vs reference (packed, int8)"

    # --- Forced-small VMEM budget: exercises a multi-step even-length grid,
    #     partial tail block and int32 output. ------------------------------
    out3 = jax.block_until_ready(
        one_hot_encoding_0d(x2, cards2, out_dtype=jnp.int32,
                            _force_budget_bytes=1 << 20))
    ref3 = _reference(x2, cards2, dtype=jnp.int32)
    assert out3.dtype == jnp.int32
    assert bool(jnp.all(out3 == ref3)), "mismatch vs reference (tiled, int32)"

    # --- Large cardinalities (> 255): f32 compute path, k == 1 --------------
    cards4 = [300, 700]
    n4 = 32
    keys4 = jax.random.split(keys2[-1], len(cards4))
    cols4 = [
        jax.random.randint(keys4[j], (n4, 1), 0, cards4[j] + 1, dtype=jnp.int32)
        for j in range(len(cards4))
    ]
    x4 = jnp.concatenate(cols4, axis=-1)
    out4 = jax.block_until_ready(one_hot_encoding_0d(x4, cards4))
    ref4 = _reference(x4, cards4, dtype=jnp.int8)
    assert bool(jnp.all(out4 == ref4)), "mismatch vs reference (large cards)"

    print("KERNEL_OK")
</pallas_src>

<mosaic_0001>
module attributes {stable_mosaic.version = 11 : i64} {
  func.func @kernel(%arg0: i32, %arg1: memref<1x32xi32, #tpu.memory_space<vmem>>, %arg2: memref<32x136xbf16, #tpu.memory_space<vmem>>, %arg3: memref<1x136xf32, #tpu.memory_space<vmem>>, %arg4: memref<1x136xi8, #tpu.memory_space<vmem>>) attributes {dimension_semantics = [#tpu.dimension_semantics<parallel>], iteration_bounds = array<i64: 1>, scalar_prefetch = 0 : i64, scratch_operands = 0 : i64, tpu.core_type = #tpu.core_type<tc>, window_params = [{transform_indices = @transform_0, window_bounds = array<i64: 1, 32>}, {pipeline_mode = #tpu.pipeline_mode<synchronous>, transform_indices = @transform_1, window_bounds = array<i64: 32, 136>}, {pipeline_mode = #tpu.pipeline_mode<synchronous>, transform_indices = @transform_2, window_bounds = array<i64: 1, 136>}, {transform_indices = @transform_3, window_bounds = array<i64: 1, 136>}]} {
    %c0 = arith.constant 0 : index
    %c0_0 = arith.constant 0 : index
    %0 = vector.load %arg1[%c0, %c0_0] : memref<1x32xi32, #tpu.memory_space<vmem>>, vector<1x32xi32>
    %1 = arith.sitofp %0 : vector<1x32xi32> to vector<1x32xf32>
    %2 = arith.truncf %1 : vector<1x32xf32> to vector<1x32xbf16>
    %c0_1 = arith.constant 0 : index
    %c0_2 = arith.constant 0 : index
    %3 = vector.load %arg2[%c0_1, %c0_2] : memref<32x136xbf16, #tpu.memory_space<vmem>>, vector<32x136xbf16>
    %cst = arith.constant dense<0.000000e+00> : vector<1x136xf32>
    %4 = tpu.matmul %2, %3, %cst {dimension_numbers = #tpu.dot_dimension_numbers<[1], [0], [0], [1], [0, 0, 1, 1], [], []>} : vector<1x32xbf16>, vector<32x136xbf16>, vector<1x136xf32> -> vector<1x136xf32>
    %c0_3 = arith.constant 0 : index
    %c0_4 = arith.constant 0 : index
    %5 = vector.load %arg3[%c0_3, %c0_4] : memref<1x136xf32, #tpu.memory_space<vmem>>, vector<1x136xf32>
    %6 = arith.cmpf oeq, %4, %5 : vector<1x136xf32>
    %7 = arith.extui %6 : vector<1x136xi1> to vector<1x136xi8>
    %c0_5 = arith.constant 0 : index
    %c0_6 = arith.constant 0 : index
    %8 = vector.load %arg4[%c0_5, %c0_6] : memref<1x136xi8, #tpu.memory_space<vmem>>, vector<1x136xi8>
    tpu.vector_store %arg4[%c0_5, %c0_6], %7 {strides = array<i32>} : memref<1x136xi8, #tpu.memory_space<vmem>>, vector<1x136xi8>,
    return
  }
  func.func @transform_0(%arg0: i32) -> (i32, i32) {
    %c0_i32 = arith.constant 0 : i32
    %c0_i32_0 = arith.constant 0 : i32
    return %arg0, %c0_i32 : i32, i32
  }
  func.func @transform_1(%arg0: i32) -> (i32, i32) {
    %c0_i32 = arith.constant 0 : i32
    %c0_i32_0 = arith.constant 0 : i32
    %c0_i32_1 = arith.constant 0 : i32
    return %c0_i32, %c0_i32_0 : i32, i32
  }
  func.func @transform_2(%arg0: i32) -> (i32, i32) {
    %c0_i32 = arith.constant 0 : i32
    %c0_i32_0 = arith.constant 0 : i32
    %c0_i32_1 = arith.constant 0 : i32
    return %c0_i32, %c0_i32_0 : i32, i32
  }
  func.func @transform_3(%arg0: i32) -> (i32, i32) {
    %c0_i32 = arith.constant 0 : i32
    %c0_i32_0 = arith.constant 0 : i32
    return %arg0, %c0_i32 : i32, i32
  }
}

</mosaic_0001>

<llo_original>
// kernel: tpu_custom_call.1
$region0: #{tpu_custom_call.1}
  #allocation0 [shape = 'u32[]', space=smem, size = 0x4, offset = 0x4, fixed_abs, tag = 'smem constant byte address 0x4 - core index']
  #allocation1 [shape = 'u32[144,128]{1,0:T(1,128)}', space=vmem, size = 0x12000, scoped, tag = 'internal scratch']
  %s0 = inlined_call_operand.hbm [shape: s32[1,32], index: 0, kind: input, shape index: {}]
  %s1 = inlined_call_operand.hbm [shape: bf16[32,136], index: 1, kind: input, shape index: {}]
  %s2 = inlined_call_operand.vmem [shape: f32[1,136], index: 2, kind: input, shape index: {}]
  %s3 = inlined_call_operand.hbm [shape: s8[1,136], index: 3, kind: output, shape index: {}]
  %s4 = sld [smem:[#allocation0]]
  $region30: #{tpu_custom_call.1} parent=0
    _
  %s6 = ssub.s32 1, %s4
  %s7 = scalar_select 0, %s6, %s4
  $region1: #{tpu_custom_call.1} parent=0
    #allocation2 [shape = 'u8[512]{0}', space=vmem, size = 0x400, scoped, tag = 'input window, operand 0, single buffered']
    #allocation3 [shape = 's32[1]{0}', space=sflag, size = 0x4, scoped, tag = 'scoped memory for tpu_custom_call.1']
    #allocation4 [shape = 's32[1]{0}', space=sflag, size = 0x4, scoped, tag = 'scoped memory for tpu_custom_call.1']
    #allocation5 [shape = 'u8[16384]{0}', space=vmem, size = 0x4000, scoped, tag = 'input window, operand 1, single buffered']
    #allocation6 [shape = 's32[1]{0}', space=sflag, size = 0x4, scoped, tag = 'scoped memory for tpu_custom_call.1']
    #allocation7 [shape = 'u8[1024]{0}', space=vmem, size = 0x400, scoped, tag = 'output window, operand 0, single buffered']
    %8 = vsyncpa [#allocation3], 0
    %9 = vsyncpa [#allocation6], 0
    %10 = vsyncpa [#allocation4], 0
    // Predicated region
    $region2: #{tpu_custom_call.1} parent=1 // pred_check
      _
    $region3: #{tpu_custom_call.1} parent=1 // pred_check_branch
      %12 = sbr.rel (0) target = $region5
    $region4: #{tpu_custom_call.1} parent=1 // pred_region
      %s14 = ssub.s32 16, 16
      %15 = vsyncadd [#allocation3], %s14
      %s17 = sshll.u32 [#allocation2], 4
      %s18 = int_to_ptr.vmem [resolvable:$true] %s17
      %20 = dma.hbm_to_vmem [thread:$0]  %s0, 16, %s18, [#allocation3]
    $region5: #{tpu_custom_call.1} parent=1 // pred_fallthru
      _
    // Predicated region
    $region6: #{tpu_custom_call.1} parent=1 // pred_check
      _
    $region7: #{tpu_custom_call.1} parent=1 // pred_check_branch
      %22 = sbr.rel (0) target = $region9
    $region8: #{tpu_custom_call.1} parent=1 // pred_region
      %s24 = ssub.s32 512, 512
      %25 = vsyncadd [#allocation6], %s24
      %s26 = sshll.u32 [#allocation5], 4
      %s27 = int_to_ptr.vmem [resolvable:$true] %s26
      %32 = dma.hbm_to_vmem [thread:$0]  %s1, 512, %s27, [#allocation6], 128, 128, 8
    $region9: #{tpu_custom_call.1} parent=1 // pred_fallthru
      _
    // Predicated region
    $region10: #{tpu_custom_call.1} parent=1 // pred_check
      _
    $region11: #{tpu_custom_call.1} parent=1 // pred_check_branch
      %34 = sbr.rel (0) target = $region13
    $region12: #{tpu_custom_call.1} parent=1 // pred_region
      _
    $region13: #{tpu_custom_call.1} parent=1 // pred_fallthru
      _
    // Predicated region
    $region14: #{tpu_custom_call.1} parent=1 // pred_check
      _
    $region15: #{tpu_custom_call.1} parent=1 // pred_check_branch
      %36 = sbr.rel (0) target = $region17
    $region16: #{tpu_custom_call.1} parent=1 // pred_region
      %37 = dma.done [#allocation3], 16
    $region17: #{tpu_custom_call.1} parent=1 // pred_fallthru
      _
    // Predicated region
    $region18: #{tpu_custom_call.1} parent=1 // pred_check
      _
    $region19: #{tpu_custom_call.1} parent=1 // pred_check_branch
      %39 = sbr.rel (0) target = $region21
    $region20: #{tpu_custom_call.1} parent=1 // pred_region
      %40 = dma.done [#allocation6], 512
    $region21: #{tpu_custom_call.1} parent=1 // pred_fallthru
      _
    %v44 = vld [vmem:[#allocation2] sm:$0x1]
    %v45 = vcvt.s32.f32 %v44
    %v46 = vpack.c.bf16 %v45, %v45
    %v47 = vld [vmem:[#allocation5] sm:$0xff]
    %v48 = vld [vmem:[#allocation5 + $0x8] sm:$0xff]
    %v49 = vld [vmem:[#allocation5 + $0x10] sm:$0xff]
    %v50 = vld [vmem:[#allocation5 + $0x18] sm:$0xff]
    %v55 = vunpack.c.l.b16 %v47
    %v56 = vunpack.c.h.b16 %v47
    %v57 = vunpack.c.l.b16 %v48
    %v58 = vunpack.c.h.b16 %v48
    %v59 = vunpack.c.l.b16 %v49
    %v60 = vunpack.c.h.b16 %v49
    %v61 = vunpack.c.l.b16 %v50
    %v62 = vunpack.c.h.b16 %v50
    %v63 = vpack.c.b16 %v57, %v55
    %v64 = vpack.c.b16 %v58, %v56
    %v65 = vpack.c.b16 %v61, %v59
    %v66 = vpack.c.b16 %v62, %v60
    %vm71 = vcmask 261120
    %v73 = vsel %vm71, %v46, 0
    %75 = vmatprep.subr.bf16.mxu0 %v64
    %76 = vmatpush1.bf16.msra.mxu0 %v63
    %77 = vmatprep.subr.bf16.mxu0 %v66
    %78 = vmatpush1.bf16.msra.mxu0 %v65
    %79 = vmatprep.subr.bf16.mxu0 0
    %80 = vmatpush1.bf16.msra.mxu0 0
    %81 = vmatprep.subr.bf16.mxu0 0
    %82 = vmatpush1.bf16.msra.mxu0 0
    %83 = vmatprep.subr.bf16.mxu0 0
    %84 = vmatpush1.bf16.msra.mxu0 0
    %85 = vmatprep.subr.bf16.mxu0 0
    %86 = vmatpush1.bf16.msra.mxu0 0
    %87 = vmatprep.subr.bf16.mxu0 0
    %88 = vmatpush1.bf16.msra.mxu0 0
    %89 = vmatprep.subr.bf16.mxu0 0
    %90 = vmatpush1.bf16.msra.mxu0 0
    %91 = vmatprep.subr.bf16.mxu0 0
    %92 = vmatpush1.bf16.msra.mxu0 0
    %93 = vmatprep.subr.bf16.mxu0 0
    %94 = vmatpush1.bf16.msra.mxu0 0
    %95 = vmatprep.subr.bf16.mxu0 0
    %96 = vmatpush1.bf16.msra.mxu0 0
    %97 = vmatprep.subr.bf16.mxu0 0
    %98 = vmatpush1.bf16.msra.mxu0 0
    %99 = vmatprep.subr.bf16.mxu0 0
    %100 = vmatpush1.bf16.msra.mxu0 0
    %101 = vmatprep.subr.bf16.mxu0 0
    %102 = vmatpush1.bf16.msra.mxu0 0
    %103 = vmatprep.subr.bf16.mxu0 0
    %104 = vmatpush1.bf16.msra.mxu0 0
    %105 = vmatprep.subr.bf16.mxu0 0
    %106 = vmatpush1.bf16.msra.mxu0 0
    %107 = vmatprep.mubr.bf16.mxu0 0
    %108 = vmatmul.mubr.bf16.gmra.mrb[0].mxu0 %v73
    %v109 = vpop.f32.mrb[0].mxu0
    %v110 = vadd.f32 0.0, %v109
    %v111 = vpop.f32.mrb[0].mxu0
    %v112 = vadd.f32 0.0, %v111
    %v113 = vpop.f32.mrb[0].mxu0
    %v114 = vpop.f32.mrb[0].mxu0
    %115 = vdwg.mxu0
    %v116 = vld [vmem:[%s2] sm:$0x3]
    %v118 = vlaneseq
    %v119 = vshrl.u32 %v118, 7
    %v120 = vsub.s32 0, %v119
    %v121 = vrot.slane %v116, %v120
    %v122 = vlaneseq
    %v123 = vshrl.u32 %v122, 7
    %v124 = vsub.s32 1, %v123
    %v125 = vrot.slane %v116, %v124
    %vm128 = vcmp.eq.f32.partialorder %v110, %v121
    %vm129 = vcmp.eq.f32.partialorder %v112, %v125
    %vm130 = vmpackc.low %vm128, %vm128
    %vm131 = vmpackc.even %vm130, %vm130
    %vm132 = vmpackc.low %vm129, %vm129
    %vm133 = vmpackc.even %vm132, %vm132
    %v134 = vsel %vm131, 16843009, 0
    %v135 = vsel %vm133, 16843009, 0
    %v136 = vcombine.low %v134, %v135
    %v138 = vunpack.c.l.s4 1966171168
    %v139 = vunpack.c.0.s8 %v138
    %v140 = vlaneseq
    %v141 = vshrl.u32 %v140, 7
    %v142 = vsub.s32 %v139, %v141
    %v143 = vrot.slane %v136, %v142
    %v145 = vunpack.c.l.s4 1966171168
    %v146 = vunpack.c.0.s8 %v145
    %v147 = vlaneseq
    %v148 = vshrl.u32 %v147, 7
    %v149 = vsub.s32 %v146, %v148
    %v150 = vrot.slane %v143, %v149
    %vm151 = vcmask 1040384
    %vm152 = vsmask.f32 0
    %vm153 = vmand %vm151, %vm152
    %vm154 = vcmask 58369
    %vm155 = vsmask.f32 1024
    %vm156 = vmand %vm154, %vm155
    %vm157 = vmor %vm156, %vm153
    %v158 = vld [vmem:[#allocation7] sm:$0x3]
    %v159 = vsel %vm157, %v150, %v158
    %160 = vst [vmem:[#allocation7] sm:$0x3] %v159
    // Predicated region
    $region22: #{tpu_custom_call.1} parent=1 // pred_check
      _
    $region23: #{tpu_custom_call.1} parent=1 // pred_check_branch
      %162 = sbr.rel (0) target = $region25
    $region24: #{tpu_custom_call.1} parent=1 // pred_region
      %s164 = ssub.s32 32, 32
      %165 = vsyncadd [#allocation4], %s164
      %s167 = sshll.u32 [#allocation7], 4
      %s168 = int_to_ptr.vmem [resolvable:$true] %s167
      %170 = dma.vmem_to_hbm [thread:$0]  %s168, 32, %s3, [#allocation4]
    $region25: #{tpu_custom_call.1} parent=1 // pred_fallthru
      _
    // Predicated region
    $region26: #{tpu_custom_call.1} parent=1 // pred_check
      _
    $region27: #{tpu_custom_call.1} parent=1 // pred_check_branch
      %172 = sbr.rel (0) target = $region29
    $region28: #{tpu_custom_call.1} parent=1 // pred_region
      %173 = dma.done [#allocation4], 32
    $region29: #{tpu_custom_call.1} parent=1 // pred_fallthru
      _
    %174 = vsyncpa [#allocation3], 1
    %175 = vsyncpa [#allocation6], 1
    %176 = vsyncpa [#allocation4], 1

</llo_original>
